<compile_context>
chip_gen: v7x
topology: tpu7x:2x2x1
jax: 0.10.0
libtpu: 0.0.40
codegen_flags: <defaults>
</compile_context>

<pallas_src>
import functools

import jax
import jax.numpy as jnp
from jax import lax
from jax.experimental import pallas as pl
from jax.experimental.pallas import tpu as pltpu


def _round_up(x, m):
    return (x + m - 1) // m * m


def _clip_lse_kernel(img_ref, txt_ref, out_ref,
                     m_row_ref, l_row_ref, m_col_ref, l_col_ref,
                     *, n, n_pad, t, rhs_transposed):
    i = pl.program_id(0)          # row-tile index (image features)
    j = pl.program_id(1)          # col-tile index (text features)
    ni = pl.num_programs(0)
    nj = pl.num_programs(1)
    padded = (n != n_pad)         # trace-time constant

    # ---- init: loss accumulator lives in the resident output block ----------
    @pl.when(jnp.logical_and(i == 0, j == 0))
    def _():
        out_ref[...] = jnp.zeros((1, 1), jnp.float32)

    @pl.when(j == 0)              # new row tile: reset row-LSE state
    def _():
        m_row_ref[...] = jnp.full((t, 1), -jnp.inf, jnp.float32)
        l_row_ref[...] = jnp.zeros((t, 1), jnp.float32)

    @pl.when(i == 0)              # first visit of column tile j: reset col-LSE state
    def _():
        m_col_ref[pl.ds(j, 1), :] = jnp.full((1, t), -jnp.inf, jnp.float32)
        l_col_ref[pl.ds(j, 1), :] = jnp.zeros((1, t), jnp.float32)

    # ---- logits tile on the MXU (f32 accumulation) ---------------------------
    if rhs_transposed:
        # txt_ref is a (D, t) tile of text_features.T  -> MXU-native orientation.
        dnums = (((1,), (0,)), ((), ()))
    else:
        # txt_ref is a (t, D) tile; contract feature dim of both operands.
        dnums = (((1,), (1,)), ((), ()))
    logits = lax.dot_general(img_ref[...], txt_ref[...], dnums,
                             preferred_element_type=jnp.float32)      # (t, t) f32

    # ---- padding: single combined mask, emitted only when padding exists -----
    if padded:
        row_valid = (lax.broadcasted_iota(jnp.int32, (t, 1), 0) + i * t) < n
        col_valid = (lax.broadcasted_iota(jnp.int32, (1, t), 1) + j * t) < n
        logits = jnp.where(jnp.logical_and(row_valid, col_valid),
                           logits, jnp.float32(-1e30))

    # ---- ONE shared exp per tile; row & col sums derived from the same p -----
    m_tile = jnp.max(logits)                              # scalar, >= every row/col max
    p = jnp.exp(logits - m_tile)                          # (t, t), values in (0, 1]
    row_sum = jnp.sum(p, axis=1, keepdims=True)           # (t, 1)
    col_sum = jnp.sum(p, axis=0, keepdims=True)           # (1, t)

    # ---- online row LSE update ------------------------------------------------
    m_prev = m_row_ref[...]
    m_new = jnp.maximum(m_prev, m_tile)
    l_row_ref[...] = (l_row_ref[...] * jnp.exp(m_prev - m_new)
                      + row_sum * jnp.exp(m_tile - m_new))
    m_row_ref[...] = m_new

    # ---- online column LSE update ---------------------------------------------
    mc_prev = m_col_ref[pl.ds(j, 1), :]
    mc_new = jnp.maximum(mc_prev, m_tile)
    l_col_ref[pl.ds(j, 1), :] = (l_col_ref[pl.ds(j, 1), :] * jnp.exp(mc_prev - mc_new)
                                 + col_sum * jnp.exp(m_tile - mc_new))
    m_col_ref[pl.ds(j, 1), :] = mc_new

    # ---- row-tile finalize (last column tile) ----------------------------------
    @pl.when(j == nj - 1)
    def _():
        lse_row = m_row_ref[...] + jnp.log(l_row_ref[...])
        if padded:
            rv = (lax.broadcasted_iota(jnp.int32, (t, 1), 0) + i * t) < n
            lse_row = jnp.where(rv, lse_row, 0.0)
        out_ref[...] += jnp.sum(lse_row, axis=0, keepdims=True)

    # ---- column-tile finalize (last row tile) -----------------------------------
    @pl.when(i == ni - 1)
    def _():
        lse_col = m_col_ref[pl.ds(j, 1), :] + jnp.log(l_col_ref[pl.ds(j, 1), :])
        if padded:
            cv = (lax.broadcasted_iota(jnp.int32, (1, t), 1) + j * t) < n
            lse_col = jnp.where(cv, lse_col, 0.0)
        out_ref[...] += jnp.sum(lse_col, axis=1, keepdims=True)


def clip_loss(image_features, text_features, logit_scale, *,
              compute_dtype=jnp.bfloat16, tile=512):
    """image_features, text_features: [N, D]; logit_scale: scalar. Returns scalar loss."""
    n, d = image_features.shape
    assert text_features.shape == (n, d)

    # Dtype-aware tile clamp: sublane minimum is 8 (f32), 16 (bf16), 32 (int8/fp8).
    itemsize = jnp.dtype(compute_dtype).itemsize
    min_sub = max(8, 32 // itemsize)
    t = min(tile, _round_up(n, min_sub))
    t = _round_up(t, min_sub)
    n_pad = _round_up(n, t)
    ni = nj = n_pad // t
    nj_rows = _round_up(nj, 8)                 # 2D col-state scratch, sublane-padded once

    # Diagonal (correct-class) logits: hoisted out of the kernel, computed once in f32
    # from the original (unscaled-precision) features.
    scale = jnp.asarray(logit_scale, jnp.float32)
    img_f32 = image_features.astype(jnp.float32)
    txt_f32 = text_features.astype(jnp.float32)
    diag_sum = scale * jnp.sum(img_f32 * txt_f32)

    # Fold the logit scale into the image features once, fused with the dtype cast.
    img = (img_f32 * scale).astype(compute_dtype)
    txt = txt_f32.astype(compute_dtype)
    if n_pad != n:
        img = jnp.pad(img, ((0, n_pad - n), (0, 0)))
        txt = jnp.pad(txt, ((0, n_pad - n), (0, 0)))

    # RHS orientation: MXU-native (D, t) text tiles when the lane dim is legal
    # (t multiple of 128, or a single column tile); else keep (t, D) tiles.
    rhs_transposed = (t % 128 == 0) or (t == n_pad)
    if rhs_transposed:
        txt_in = txt.T                                           # (D, N_pad), one-time XLA transpose
        txt_spec = pl.BlockSpec((d, t), lambda i, j: (0, j))
    else:
        txt_in = txt
        txt_spec = pl.BlockSpec((t, d), lambda i, j: (j, 0))

    # Scoped-VMEM budget sized to the tile: double-buffered inputs + live (t,t) f32
    # temps + LSE state.  Raised above the 16/32 MiB defaults, capped for v7x (64 MiB).
    vmem_bytes = (2 * 2 * t * d * itemsize        # img + txt tiles, double-buffered
                  + 6 * t * t * 4                 # logits / p / mask temps (f32)
                  + 2 * nj_rows * t * 4           # column-LSE state
                  + 8 * t * 4                     # row-LSE state + slop
                  + (2 << 20))                    # headroom
    vmem_limit = int(min(max(vmem_bytes, 32 << 20), 64 << 20))

    kernel = functools.partial(_clip_lse_kernel, n=n, n_pad=n_pad, t=t,
                               rhs_transposed=rhs_transposed)

    lse_sum = pl.pallas_call(
        kernel,
        out_shape=jax.ShapeDtypeStruct((1, 1), jnp.float32),
        grid_spec=pltpu.PrefetchScalarGridSpec(
            num_scalar_prefetch=0,
            grid=(ni, nj),
            in_specs=[
                pl.BlockSpec((t, d), lambda i, j: (i, 0)),   # image tile (rows), resident across j
                txt_spec,                                     # text tile (cols), streamed per step
            ],
            out_specs=pl.BlockSpec((1, 1), lambda i, j: (0, 0)),
            scratch_shapes=[
                pltpu.VMEM((t, 1), jnp.float32),              # running row max
                pltpu.VMEM((t, 1), jnp.float32),              # running row sum-exp
                pltpu.VMEM((nj_rows, t), jnp.float32),        # running col max (all col tiles)
                pltpu.VMEM((nj_rows, t), jnp.float32),        # running col sum-exp
            ],
        ),
        # Both axes "arbitrary": column-LSE state and the loss accumulator are carried
        # across the row-tile axis.  See TODO(synk) above for the v7x megacore split.
        compiler_params=pltpu.CompilerParams(
            dimension_semantics=("arbitrary", "arbitrary"),
            vmem_limit_bytes=vmem_limit,
        ),
    )(img, txt_in)

    # Epilogue: 0.5/N * (sum_row_lse + sum_col_lse - 2 * sum_diag).
    # TODO(synk): for very large N, return per-row-tile partial sums to avoid f32 drift.
    return (lse_sum[0, 0] - 2.0 * diag_sum) * (0.5 / n)


def clip_loss_ref(image_features, text_features, logit_scale):
    logits = logit_scale * image_features @ text_features.T
    lse_i = jax.nn.logsumexp(logits, axis=1)
    lse_t = jax.nn.logsumexp(logits.T, axis=1)
    diag = jnp.diag(logits)
    return 0.5 * (jnp.mean(lse_i - diag) + jnp.mean(lse_t - diag))


if __name__ == "__main__":
    root = jax.random.PRNGKey(0)

    def make_inputs(key, n, d):
        k1, k2 = jax.random.split(key)
        img = jax.random.normal(k1, (n, d), jnp.float32)
        txt = jax.random.normal(k2, (n, d), jnp.float32)
        img = img / jnp.linalg.norm(img, axis=-1, keepdims=True)
        txt = txt / jnp.linalg.norm(txt, axis=-1, keepdims=True)
        return img, txt

    logit_scale = jnp.exp(jnp.float32(jnp.log(1.0 / 0.07)))
    k1, k2, k3, k4, k5 = jax.random.split(root, 5)

    # 1) batch=8, hidden=32 — single tile, f32 path (tight check, transposed-RHS branch).
    img, txt = make_inputs(k1, 8, 32)
    ref = clip_loss_ref(img, txt, logit_scale)
    got = jax.block_until_ready(
        clip_loss(img, txt, logit_scale, compute_dtype=jnp.float32))
    assert jnp.allclose(got, ref, rtol=1e-4, atol=1e-4), (got, ref)

    # 2) same inputs, default bf16-MXU path (f32 accumulation) — bf16 + padded (t=16 > N).
    got_bf16 = jax.block_until_ready(clip_loss(img, txt, logit_scale))
    assert jnp.allclose(got_bf16, ref, rtol=3e-2, atol=3e-1), (got_bf16, ref)

    # 3) batch=32, tile=8, f32 — 4x4 grid exercises online row/col LSE across tiles.
    img3, txt3 = make_inputs(k2, 32, 32)
    ref3 = clip_loss_ref(img3, txt3, logit_scale)
    got3 = jax.block_until_ready(
        clip_loss(img3, txt3, logit_scale, compute_dtype=jnp.float32, tile=8))
    assert jnp.allclose(got3, ref3, rtol=1e-4, atol=1e-4), (got3, ref3)

    # 4) batch=20, tile=8, f32 — padded (N not a tile multiple) masking path, multi-tile.
    img4, txt4 = make_inputs(k3, 20, 32)
    ref4 = clip_loss_ref(img4, txt4, logit_scale)
    got4 = jax.block_until_ready(
        clip_loss(img4, txt4, logit_scale, compute_dtype=jnp.float32, tile=8))
    assert jnp.allclose(got4, ref4, rtol=1e-4, atol=1e-4), (got4, ref4)

    # 5) batch=24, tile=8, bf16 — padded + bf16 + multi-tile (t rounds up to 16).
    img5, txt5 = make_inputs(k4, 24, 32)
    ref5 = clip_loss_ref(img5, txt5, logit_scale)
    got5 = jax.block_until_ready(clip_loss(img5, txt5, logit_scale, tile=8))
    assert jnp.allclose(got5, ref5, rtol=3e-2, atol=3e-1), (got5, ref5)

    # 6) batch=256, hidden=128, tile=128, f32 — 2x2 grid through the 128-aligned
    #    transposed-RHS (MXU-native) production path.
    img6, txt6 = make_inputs(k5, 256, 128)
    ref6 = clip_loss_ref(img6, txt6, logit_scale)
    got6 = jax.block_until_ready(
        clip_loss(img6, txt6, logit_scale, compute_dtype=jnp.float32, tile=128))
    assert jnp.allclose(got6, ref6, rtol=1e-4, atol=1e-4), (got6, ref6)

    print("KERNEL_OK")
</pallas_src>

<mosaic_0001>
module attributes {stable_mosaic.version = 11 : i64} {
  func.func @_clip_lse_kernel(%arg0: i32, %arg1: i32, %arg2: memref<8x32xf32, #tpu.memory_space<vmem>>, %arg3: memref<32x8xf32, #tpu.memory_space<vmem>>, %arg4: memref<1x1xf32, #tpu.memory_space<vmem>>, %arg5: memref<8x1xf32, #tpu.memory_space<vmem>>, %arg6: memref<8x1xf32, #tpu.memory_space<vmem>>, %arg7: memref<8x8xf32, #tpu.memory_space<vmem>>, %arg8: memref<8x8xf32, #tpu.memory_space<vmem>>) attributes {dimension_semantics = [#tpu.dimension_semantics<arbitrary>, #tpu.dimension_semantics<arbitrary>], iteration_bounds = array<i64: 1, 1>, scalar_prefetch = 0 : i64, scratch_operands = 4 : i64, tpu.core_type = #tpu.core_type<tc>, window_params = [{transform_indices = @transform_0, window_bounds = array<i64: 8, 32>}, {transform_indices = @transform_1, window_bounds = array<i64: 32, 8>}, {pipeline_mode = #tpu.pipeline_mode<synchronous>, transform_indices = @transform_2, window_bounds = array<i64: 1, 1>}]} {
    %c0_i32 = arith.constant 0 : i32
    %0 = arith.cmpi eq, %arg0, %c0_i32 : i32
    %c0_i32_0 = arith.constant 0 : i32
    %1 = arith.cmpi eq, %arg1, %c0_i32_0 : i32
    %2 = arith.andi %0, %1 : i1
    %3 = arith.extui %2 : i1 to i32
    %c0_i32_1 = arith.constant 0 : i32
    %4 = arith.cmpi ne, %3, %c0_i32_1 : i32
    scf.if %4 {
      %cst_28 = arith.constant 0.000000e+00 : f32
      %63 = vector.broadcast %cst_28 : f32 to vector<1x1xf32>
      %c0_29 = arith.constant 0 : index
      %c0_30 = arith.constant 0 : index
      %64 = vector.load %arg4[%c0_29, %c0_30] : memref<1x1xf32, #tpu.memory_space<vmem>>, vector<1x1xf32>
      tpu.vector_store %arg4[%c0_29, %c0_30], %63 {strides = array<i32>} : memref<1x1xf32, #tpu.memory_space<vmem>>, vector<1x1xf32>,
    } else {
    }
    %c0_i32_2 = arith.constant 0 : i32
    %5 = arith.cmpi eq, %arg1, %c0_i32_2 : i32
    %6 = arith.extui %5 : i1 to i32
    %c0_i32_3 = arith.constant 0 : i32
    %7 = arith.cmpi ne, %6, %c0_i32_3 : i32
    scf.if %7 {
      %cst_28 = arith.constant 0xFF800000 : f32
      %63 = vector.broadcast %cst_28 : f32 to vector<8x1xf32>
      %c0_29 = arith.constant 0 : index
      %c0_30 = arith.constant 0 : index
      %64 = vector.load %arg5[%c0_29, %c0_30] : memref<8x1xf32, #tpu.memory_space<vmem>>, vector<8x1xf32>
      tpu.vector_store %arg5[%c0_29, %c0_30], %63 {strides = array<i32>} : memref<8x1xf32, #tpu.memory_space<vmem>>, vector<8x1xf32>,
      %cst_31 = arith.constant 0.000000e+00 : f32
      %65 = vector.broadcast %cst_31 : f32 to vector<8x1xf32>
      %c0_32 = arith.constant 0 : index
      %c0_33 = arith.constant 0 : index
      %66 = vector.load %arg6[%c0_32, %c0_33] : memref<8x1xf32, #tpu.memory_space<vmem>>, vector<8x1xf32>
      tpu.vector_store %arg6[%c0_32, %c0_33], %65 {strides = array<i32>} : memref<8x1xf32, #tpu.memory_space<vmem>>, vector<8x1xf32>,
    } else {
    }
    %c0_i32_4 = arith.constant 0 : i32
    %8 = arith.cmpi eq, %arg0, %c0_i32_4 : i32
    %9 = arith.extui %8 : i1 to i32
    %c0_i32_5 = arith.constant 0 : i32
    %10 = arith.cmpi ne, %9, %c0_i32_5 : i32
    scf.if %10 {
      %cst_28 = arith.constant 0xFF800000 : f32
      %63 = vector.broadcast %cst_28 : f32 to vector<1x8xf32>
      %64 = arith.index_cast %arg1 : i32 to index
      %c0_29 = arith.constant 0 : index
      %65 = vector.load %arg7[%64, %c0_29] : memref<8x8xf32, #tpu.memory_space<vmem>>, vector<1x8xf32>
      tpu.vector_store %arg7[%64, %c0_29], %63 {strides = array<i32>} : memref<8x8xf32, #tpu.memory_space<vmem>>, vector<1x8xf32>,
      %cst_30 = arith.constant 0.000000e+00 : f32
      %66 = vector.broadcast %cst_30 : f32 to vector<1x8xf32>
      %67 = arith.index_cast %arg1 : i32 to index
      %c0_31 = arith.constant 0 : index
      %68 = vector.load %arg8[%67, %c0_31] : memref<8x8xf32, #tpu.memory_space<vmem>>, vector<1x8xf32>
      tpu.vector_store %arg8[%67, %c0_31], %66 {strides = array<i32>} : memref<8x8xf32, #tpu.memory_space<vmem>>, vector<1x8xf32>,
    } else {
    }
    %c0 = arith.constant 0 : index
    %c0_6 = arith.constant 0 : index
    %11 = vector.load %arg2[%c0, %c0_6] : memref<8x32xf32, #tpu.memory_space<vmem>>, vector<8x32xf32>
    %c0_7 = arith.constant 0 : index
    %c0_8 = arith.constant 0 : index
    %12 = vector.load %arg3[%c0_7, %c0_8] : memref<32x8xf32, #tpu.memory_space<vmem>>, vector<32x8xf32>
    %cst = arith.constant dense<0.000000e+00> : vector<8x8xf32>
    %13 = tpu.matmul %11, %12, %cst {dimension_numbers = #tpu.dot_dimension_numbers<[1], [0], [0], [1], [0, 0, 1, 1], [], []>} : vector<8x32xf32>, vector<32x8xf32>, vector<8x8xf32> -> vector<8x8xf32>
    %14 = vector.shape_cast %13 : vector<8x8xf32> to vector<1x8x8xf32>
    %cst_9 = arith.constant dense<0xFF800000> : vector<1xf32>
    %15 = vector.multi_reduction <maximumf>, %14, %cst_9 [1, 2] : vector<1x8x8xf32> to vector<1xf32>
    %16 = vector.shape_cast %15 : vector<1xf32> to vector<1x1x1xf32>
    %17 = vector.extract %16[0, 0, 0] : f32 from vector<1x1x1xf32>
    %18 = vector.broadcast %17 : f32 to vector<8x8xf32>
    %19 = arith.subf %13, %18 : vector<8x8xf32>
    %20 = math.exp %19 : vector<8x8xf32>
    %cst_10 = arith.constant dense<0.000000e+00> : vector<8xf32>
    %21 = vector.multi_reduction <add>, %20, %cst_10 [1] : vector<8x8xf32> to vector<8xf32>
    %22 = vector.shape_cast %21 : vector<8xf32> to vector<8x1xf32>
    %cst_11 = arith.constant dense<0.000000e+00> : vector<8xf32>
    %23 = vector.multi_reduction <add>, %20, %cst_11 [0] : vector<8x8xf32> to vector<8xf32>
    %24 = vector.shape_cast %23 : vector<8xf32> to vector<1x8xf32>
    %c0_12 = arith.constant 0 : index
    %c0_13 = arith.constant 0 : index
    %25 = vector.load %arg5[%c0_12, %c0_13] : memref<8x1xf32, #tpu.memory_space<vmem>>, vector<8x1xf32>
    %26 = vector.broadcast %17 : f32 to vector<8x1xf32>
    %27 = arith.maximumf %25, %26 : vector<8x1xf32>
    %c0_14 = arith.constant 0 : index
    %c0_15 = arith.constant 0 : index
    %28 = vector.load %arg6[%c0_14, %c0_15] : memref<8x1xf32, #tpu.memory_space<vmem>>, vector<8x1xf32>
    %29 = arith.subf %25, %27 : vector<8x1xf32>
    %30 = math.exp %29 : vector<8x1xf32>
    %31 = arith.mulf %28, %30 : vector<8x1xf32>
    %32 = vector.broadcast %17 : f32 to vector<8x1xf32>
    %33 = arith.subf %32, %27 : vector<8x1xf32>
    %34 = math.exp %33 : vector<8x1xf32>
    %35 = arith.mulf %22, %34 : vector<8x1xf32>
    %36 = arith.addf %31, %35 : vector<8x1xf32>
    %c0_16 = arith.constant 0 : index
    %c0_17 = arith.constant 0 : index
    %37 = vector.load %arg6[%c0_16, %c0_17] : memref<8x1xf32, #tpu.memory_space<vmem>>, vector<8x1xf32>
    tpu.vector_store %arg6[%c0_16, %c0_17], %36 {strides = array<i32>} : memref<8x1xf32, #tpu.memory_space<vmem>>, vector<8x1xf32>,
    %c0_18 = arith.constant 0 : index
    %c0_19 = arith.constant 0 : index
    %38 = vector.load %arg5[%c0_18, %c0_19] : memref<8x1xf32, #tpu.memory_space<vmem>>, vector<8x1xf32>
    tpu.vector_store %arg5[%c0_18, %c0_19], %27 {strides = array<i32>} : memref<8x1xf32, #tpu.memory_space<vmem>>, vector<8x1xf32>,
    %39 = arith.index_cast %arg1 : i32 to index
    %c0_20 = arith.constant 0 : index
    %40 = vector.load %arg7[%39, %c0_20] : memref<8x8xf32, #tpu.memory_space<vmem>>, vector<1x8xf32>
    %41 = vector.broadcast %17 : f32 to vector<1x8xf32>
    %42 = arith.maximumf %40, %41 : vector<1x8xf32>
    %43 = arith.index_cast %arg1 : i32 to index
    %c0_21 = arith.constant 0 : index
    %44 = vector.load %arg8[%43, %c0_21] : memref<8x8xf32, #tpu.memory_space<vmem>>, vector<1x8xf32>
    %45 = arith.subf %40, %42 : vector<1x8xf32>
    %46 = math.exp %45 : vector<1x8xf32>
    %47 = arith.mulf %44, %46 : vector<1x8xf32>
    %48 = vector.broadcast %17 : f32 to vector<1x8xf32>
    %49 = arith.subf %48, %42 : vector<1x8xf32>
    %50 = math.exp %49 : vector<1x8xf32>
    %51 = arith.mulf %24, %50 : vector<1x8xf32>
    %52 = arith.addf %47, %51 : vector<1x8xf32>
    %53 = arith.index_cast %arg1 : i32 to index
    %c0_22 = arith.constant 0 : index
    %54 = vector.load %arg8[%53, %c0_22] : memref<8x8xf32, #tpu.memory_space<vmem>>, vector<1x8xf32>
    tpu.vector_store %arg8[%53, %c0_22], %52 {strides = array<i32>} : memref<8x8xf32, #tpu.memory_space<vmem>>, vector<1x8xf32>,
    %55 = arith.index_cast %arg1 : i32 to index
    %c0_23 = arith.constant 0 : index
    %56 = vector.load %arg7[%55, %c0_23] : memref<8x8xf32, #tpu.memory_space<vmem>>, vector<1x8xf32>
    tpu.vector_store %arg7[%55, %c0_23], %42 {strides = array<i32>} : memref<8x8xf32, #tpu.memory_space<vmem>>, vector<1x8xf32>,
    %c0_i32_24 = arith.constant 0 : i32
    %57 = arith.cmpi eq, %arg1, %c0_i32_24 : i32
    %58 = arith.extui %57 : i1 to i32
    %c0_i32_25 = arith.constant 0 : i32
    %59 = arith.cmpi ne, %58, %c0_i32_25 : i32
    scf.if %59 {
      %c0_28 = arith.constant 0 : index
      %c0_29 = arith.constant 0 : index
      %63 = vector.load %arg5[%c0_28, %c0_29] : memref<8x1xf32, #tpu.memory_space<vmem>>, vector<8x1xf32>
      %c0_30 = arith.constant 0 : index
      %c0_31 = arith.constant 0 : index
      %64 = vector.load %arg6[%c0_30, %c0_31] : memref<8x1xf32, #tpu.memory_space<vmem>>, vector<8x1xf32>
      %65 = math.log %64 : vector<8x1xf32>
      %66 = arith.addf %63, %65 : vector<8x1xf32>
      %c0_32 = arith.constant 0 : index
      %c0_33 = arith.constant 0 : index
      %67 = vector.load %arg4[%c0_32, %c0_33] : memref<1x1xf32, #tpu.memory_space<vmem>>, vector<1x1xf32>
      %cst_34 = arith.constant dense<0.000000e+00> : vector<1xf32>
      %68 = vector.multi_reduction <add>, %66, %cst_34 [0] : vector<8x1xf32> to vector<1xf32>
      %69 = vector.shape_cast %68 : vector<1xf32> to vector<1x1xf32>
      %70 = arith.addf %67, %69 : vector<1x1xf32>
      %c0_35 = arith.constant 0 : index
      %c0_36 = arith.constant 0 : index
      %71 = vector.load %arg4[%c0_35, %c0_36] : memref<1x1xf32, #tpu.memory_space<vmem>>, vector<1x1xf32>
      tpu.vector_store %arg4[%c0_35, %c0_36], %70 {strides = array<i32>} : memref<1x1xf32, #tpu.memory_space<vmem>>, vector<1x1xf32>,
    } else {
    }
    %c0_i32_26 = arith.constant 0 : i32
    %60 = arith.cmpi eq, %arg0, %c0_i32_26 : i32
    %61 = arith.extui %60 : i1 to i32
    %c0_i32_27 = arith.constant 0 : i32
    %62 = arith.cmpi ne, %61, %c0_i32_27 : i32
    scf.if %62 {
      %63 = arith.index_cast %arg1 : i32 to index
      %c0_28 = arith.constant 0 : index
      %64 = vector.load %arg7[%63, %c0_28] : memref<8x8xf32, #tpu.memory_space<vmem>>, vector<1x8xf32>
      %65 = arith.index_cast %arg1 : i32 to index
      %c0_29 = arith.constant 0 : index
      %66 = vector.load %arg8[%65, %c0_29] : memref<8x8xf32, #tpu.memory_space<vmem>>, vector<1x8xf32>
      %67 = math.log %66 : vector<1x8xf32>
      %68 = arith.addf %64, %67 : vector<1x8xf32>
      %c0_30 = arith.constant 0 : index
      %c0_31 = arith.constant 0 : index
      %69 = vector.load %arg4[%c0_30, %c0_31] : memref<1x1xf32, #tpu.memory_space<vmem>>, vector<1x1xf32>
      %cst_32 = arith.constant dense<0.000000e+00> : vector<1xf32>
      %70 = vector.multi_reduction <add>, %68, %cst_32 [1] : vector<1x8xf32> to vector<1xf32>
      %71 = vector.shape_cast %70 : vector<1xf32> to vector<1x1xf32>
      %72 = arith.addf %69, %71 : vector<1x1xf32>
      %c0_33 = arith.constant 0 : index
      %c0_34 = arith.constant 0 : index
      %73 = vector.load %arg4[%c0_33, %c0_34] : memref<1x1xf32, #tpu.memory_space<vmem>>, vector<1x1xf32>
      tpu.vector_store %arg4[%c0_33, %c0_34], %72 {strides = array<i32>} : memref<1x1xf32, #tpu.memory_space<vmem>>, vector<1x1xf32>,
    } else {
    }
    return
  }
  func.func @transform_0(%arg0: i32, %arg1: i32) -> (i32, i32) {
    %c0_i32 = arith.constant 0 : i32
    %c0_i32_0 = arith.constant 0 : i32
    return %arg0, %c0_i32 : i32, i32
  }
  func.func @transform_1(%arg0: i32, %arg1: i32) -> (i32, i32) {
    %c0_i32 = arith.constant 0 : i32
    %c0_i32_0 = arith.constant 0 : i32
    return %c0_i32, %arg1 : i32, i32
  }
  func.func @transform_2(%arg0: i32, %arg1: i32) -> (i32, i32) {
    %c0_i32 = arith.constant 0 : i32
    %c0_i32_0 = arith.constant 0 : i32
    %c0_i32_1 = arith.constant 0 : i32
    return %c0_i32, %c0_i32_0 : i32, i32
  }
}

</mosaic_0001>

<llo_original>
// kernel: tpu_custom_call.1
$region0: #{tpu_custom_call.1}
  #allocation0 [shape = 'u32[]', space=smem, size = 0x4, offset = 0x4, fixed_abs, tag = 'smem constant byte address 0x4 - core index']
  #allocation1 [shape = 'u32[144,128]{1,0:T(1,128)}', space=vmem, size = 0x12000, scoped, tag = 'internal scratch']
  #allocation2 [shape = 'f32[8,1]{1,0:T(8,128)}', space=vmem, size = 0x1000, scoped, tag = 'scratch operand']
  #allocation3 [shape = 'f32[8,1]{1,0:T(8,128)}', space=vmem, size = 0x1000, scoped, tag = 'scratch operand']
  #allocation4 [shape = 'f32[8,8]{1,0:T(8,128)}', space=vmem, size = 0x1000, scoped, tag = 'scratch operand']
  #allocation5 [shape = 'f32[8,8]{1,0:T(8,128)}', space=vmem, size = 0x1000, scoped, tag = 'scratch operand']
  %s0 = inlined_call_operand.vmem [shape: f32[8,32], index: 0, kind: input, shape index: {}]
  %s1 = inlined_call_operand.vmem [shape: f32[32,8], index: 1, kind: input, shape index: {}]
  %s2 = inlined_call_operand.hbm [shape: f32[1,1], index: 2, kind: output, shape index: {}]
  %s3 = sld [smem:[#allocation0]]
  $region38: #{tpu_custom_call.1} parent=0
    _
  %s5 = ssub.s32 1, %s3
  %s6 = scalar_select 0, %s5, %s3
  $region1: #{tpu_custom_call.1} parent=0
    #allocation6 [shape = 'u8[512]{0}', space=vmem, size = 0x400, scoped, tag = 'output window, operand 0, single buffered']
    #allocation7 [shape = 's32[1]{0}', space=sflag, size = 0x4, scoped, tag = 'scoped memory for tpu_custom_call.1']
    %7 = vsyncpa [#allocation7], 0
    // Predicated region
    $region2: #{tpu_custom_call.1} parent=1 // pred_check
      _
    $region3: #{tpu_custom_call.1} parent=1 // pred_check_branch
      %9 = sbr.rel (0) target = $region5
    $region4: #{tpu_custom_call.1} parent=1 // pred_region
      _
    $region5: #{tpu_custom_call.1} parent=1 // pred_fallthru
      _
    // Predicated region
    $region6: #{tpu_custom_call.1} parent=1 // pred_check
      _
    $region7: #{tpu_custom_call.1} parent=1 // pred_check_branch
      %11 = sbr.rel (0) target = $region9
    $region8: #{tpu_custom_call.1} parent=1 // pred_region
      _
    $region9: #{tpu_custom_call.1} parent=1 // pred_fallthru
      _
    %p12 = scmp.eq.s32.totalorder 0, 0
    %p13 = scmp.eq.s32.totalorder 0, 0
    %p14 = pnand %p12, %p13
    %p15 = pneg %p14
    // Predicated region
    $region10: #{tpu_custom_call.1} parent=1 // pred_check
      _
    $region11: #{tpu_custom_call.1} parent=1 // pred_check_branch
      %17 = sbr.rel (%p14) target = $region13
    $region12: #{tpu_custom_call.1} parent=1 // pred_region
      %vm18 = vcmask 0
      %19 = vst.msk [vmem:[#allocation6] sm:$0x1] %vm18, 0.0
    $region13: #{tpu_custom_call.1} parent=1 // pred_fallthru
      _
    // Predicated region
    $region14: #{tpu_custom_call.1} parent=1 // pred_check
      %p20 = pneg %p13
    $region15: #{tpu_custom_call.1} parent=1 // pred_check_branch
      %22 = sbr.rel (%p20) target = $region17
    $region16: #{tpu_custom_call.1} parent=1 // pred_region
      %vm23 = vcmask 7168
      %24 = vst.msk [vmem:[#allocation2] sm:$0xff] %vm23, -inf
      %25 = vst.msk [vmem:[#allocation3] sm:$0xff] %vm23, 0.0
    $region17: #{tpu_custom_call.1} parent=1 // pred_fallthru
      _
    // Predicated region
    $region18: #{tpu_custom_call.1} parent=1 // pred_check
      %p26 = pneg %p12
    $region19: #{tpu_custom_call.1} parent=1 // pred_check_branch
      %28 = sbr.rel (%p26) target = $region21
    $region20: #{tpu_custom_call.1} parent=1 // pred_region
      %vm29 = vcmask 57344
      %30 = vst.msk [vmem:[#allocation4] sm:$0x1] %vm29, -inf
      %31 = vst.msk [vmem:[#allocation5] sm:$0x1] %vm29, 0.0
    $region21: #{tpu_custom_call.1} parent=1 // pred_fallthru
      _
    %v32 = vld [vmem:[%s0] sm:$0xff]
    %v33 = vld [vmem:[%s1] sm:$0xff]
    %v34 = vld [vmem:[%s1 + $0x8] sm:$0xff]
    %v35 = vld [vmem:[%s1 + $0x10] sm:$0xff]
    %v36 = vld [vmem:[%s1 + $0x18] sm:$0xff]
    %vm37 = vcmask 261120
    %v39 = vsel %vm37, %v32, 0
    %41 = vmatprep.subr.mxu0 0.0
    %42 = vmatpush1.msra.mxu0 %v33
    %43 = vmatprep.subr.mxu0 0.0
    %44 = vmatpush1.msra.mxu0 %v34
    %45 = vmatprep.subr.mxu0 0.0
    %46 = vmatpush1.msra.mxu0 %v35
    %47 = vmatprep.subr.mxu0 0.0
    %48 = vmatpush1.msra.mxu0 %v36
    %49 = vmatprep.subr.mxu0 0.0
    %50 = vmatpush1.msra.mxu0 0.0
    %51 = vmatprep.subr.mxu0 0.0
    %52 = vmatpush1.msra.mxu0 0.0
    %53 = vmatprep.subr.mxu0 0.0
    %54 = vmatpush1.msra.mxu0 0.0
    %55 = vmatprep.subr.mxu0 0.0
    %56 = vmatpush1.msra.mxu0 0.0
    %57 = vmatprep.subr.mxu0 0.0
    %58 = vmatpush1.msra.mxu0 0.0
    %59 = vmatprep.subr.mxu0 0.0
    %60 = vmatpush1.msra.mxu0 0.0
    %61 = vmatprep.subr.mxu0 0.0
    %62 = vmatpush1.msra.mxu0 0.0
    %63 = vmatprep.subr.mxu0 0.0
    %64 = vmatpush1.msra.mxu0 0.0
    %65 = vmatprep.subr.mxu0 0.0
    %66 = vmatpush1.msra.mxu0 0.0
    %67 = vmatprep.subr.mxu0 0.0
    %68 = vmatpush1.msra.mxu0 0.0
    %69 = vmatprep.subr.mxu0 0.0
    %70 = vmatpush1.msra.mxu0 0.0
    %71 = vmatprep.subr.mxu0 0.0
    %72 = vmatpush1.msra.mxu0 0.0
    %73 = vmatprep.subr.mxu0 0.0
    %74 = vmatpush1.msra.mxu0 0.0
    %75 = vmatprep.subr.mxu0 0.0
    %76 = vmatpush1.msra.mxu0 0.0
    %77 = vmatprep.subr.mxu0 0.0
    %78 = vmatpush1.msra.mxu0 0.0
    %79 = vmatprep.subr.mxu0 0.0
    %80 = vmatpush1.msra.mxu0 0.0
    %81 = vmatprep.subr.mxu0 0.0
    %82 = vmatpush1.msra.mxu0 0.0
    %83 = vmatprep.subr.mxu0 0.0
    %84 = vmatpush1.msra.mxu0 0.0
    %85 = vmatprep.subr.mxu0 0.0
    %86 = vmatpush1.msra.mxu0 0.0
    %87 = vmatprep.subr.mxu0 0.0
    %88 = vmatpush1.msra.mxu0 0.0
    %89 = vmatprep.subr.mxu0 0.0
    %90 = vmatpush1.msra.mxu0 0.0
    %91 = vmatprep.subr.mxu0 0.0
    %92 = vmatpush1.msra.mxu0 0.0
    %93 = vmatprep.subr.mxu0 0.0
    %94 = vmatpush1.msra.mxu0 0.0
    %95 = vmatprep.subr.mxu0 0.0
    %96 = vmatpush1.msra.mxu0 0.0
    %97 = vmatprep.subr.mxu0 0.0
    %98 = vmatpush1.msra.mxu0 0.0
    %99 = vmatprep.subr.mxu0 0.0
    %100 = vmatpush1.msra.mxu0 0.0
    %101 = vmatprep.subr.mxu0 0.0
    %102 = vmatpush1.msra.mxu0 0.0
    %103 = vmatprep.subr.mxu0 0.0
    %104 = vmatpush1.msra.mxu0 0.0
    %105 = vmatprep.mubr.f32.mxu0 0.0
    %106 = vmatmul.mubr.f32.gmra.mrb[0].mxu0 %v39
    %v107 = vpop.f32.mrb[0].mxu0
    %v108 = vadd.f32 0.0, %v107
    %v109 = vpop.f32.mrb[0].mxu0
    %110 = vdwg.mxu0
    %vm111 = vcmask 64512
    %v112 = vsel %vm111, %v108, -inf
    %113 = vmax.xlane.f32.xlu0 %v112
    %v114 = vpop.xlane.xlu0 %113
    %v115 = vrot.slane %v114, 4
    %v116 = vmax.f32 %v114, %v115
    %v117 = vrot.slane %v116, 2
    %v118 = vmax.f32 %v116, %v117
    %v119 = vrot.slane %v118, 1
    %v120 = vmax.f32 %v118, %v119
    %s121 = vtos %v120
    %v122 = vstv %s121
    %v123 = vsub.f32 %v108, %v122
    %v124 = vmul.f32 %v123, 1.442695
    %v125 = vpow.pop %v124
    %v126 = vsel %vm111, %v125, 0.0
    %127 = vadd.xlane.f32.xlu0 %v126
    %v128 = vpop.xlane.xlu0 %127
    %v129 = vrot.slane %v126, 4
    %v130 = vadd.f32 %v126, %v129
    %v131 = vrot.slane %v130, 2
    %v132 = vadd.f32 %v130, %v131
    %v133 = vrot.slane %v132, 1
    %v134 = vadd.f32 %v132, %v133
    %v135 = vld [vmem:[#allocation2] sm:$0xff]
    %v136 = vmax.f32 %v135, %v122
    %v137 = vld [vmem:[#allocation3] sm:$0xff]
    %v138 = vsub.f32 %v135, %v136
    %v139 = vmul.f32 %v138, 1.442695
    %v140 = vpow.pop %v139
    %v141 = vmul.f32 %v137, %v140
    %v142 = vsub.f32 %v122, %v136
    %v143 = vmul.f32 %v142, 1.442695
    %v144 = vpow.pop %v143
    %v145 = vmul.f32 %v128, %v144
    %v146 = vadd.f32 %v141, %v145
    %vm147 = vcmask 7168
    %148 = vst.msk [vmem:[#allocation3] sm:$0xff] %vm147, %v146
    %149 = vst.msk [vmem:[#allocation2] sm:$0xff] %vm147, %v136
    %v150 = vld [vmem:[#allocation4] sm:$0x1]
    %v151 = vmax.f32 %v150, %v122
    %v152 = vld [vmem:[#allocation5] sm:$0x1]
    %v153 = vsub.f32 %v150, %v151
    %v154 = vmul.f32 %v153, 1.442695
    %v155 = vpow.pop %v154
    %v156 = vmul.f32 %v152, %v155
    %v157 = vsub.f32 %v122, %v151
    %v158 = vmul.f32 %v157, 1.442695
    %v159 = vpow.pop %v158
    %v160 = vmul.f32 %v134, %v159
    %v161 = vadd.f32 %v156, %v160
    %vm162 = vcmask 57344
    %163 = vst.msk [vmem:[#allocation5] sm:$0x1] %vm162, %v161
    %164 = vst.msk [vmem:[#allocation4] sm:$0x1] %vm162, %v151
    // Predicated region
    $region22: #{tpu_custom_call.1} parent=1 // pred_check
      %p165 = pneg %p13
    $region23: #{tpu_custom_call.1} parent=1 // pred_check_branch
      %167 = sbr.rel (%p165) target = $region25
    $region24: #{tpu_custom_call.1} parent=1 // pred_region
      %v168 = vld [vmem:[#allocation2] sm:$0xff]
      %v169 = vld [vmem:[#allocation3] sm:$0xff]
      %v170 = vlog2.pop %v169
      %v171 = vmul.f32 %v170, 0.6931472
      %v172 = vadd.f32 %v168, %v171
      %v173 = vld [vmem:[#allocation6] sm:$0x1]
      %v174 = vsel %vm147, %v172, 0.0
      %v175 = vrot.slane %v174, 4
      %v176 = vadd.f32 %v174, %v175
      %v177 = vrot.slane %v176, 2
      %v178 = vadd.f32 %v176, %v177
      %v179 = vrot.slane %v178, 1
      %v180 = vadd.f32 %v178, %v179
      %v181 = vadd.f32 %v173, %v180
      %vm182 = vcmask 0
      %183 = vst.msk [vmem:[#allocation6] sm:$0x1] %vm182, %v181
    $region25: #{tpu_custom_call.1} parent=1 // pred_fallthru
      _
    // Predicated region
    $region26: #{tpu_custom_call.1} parent=1 // pred_check
      %p184 = pneg %p12
    $region27: #{tpu_custom_call.1} parent=1 // pred_check_branch
      %186 = sbr.rel (%p184) target = $region29
    $region28: #{tpu_custom_call.1} parent=1 // pred_region
      %v187 = vld [vmem:[#allocation4] sm:$0x1]
      %v188 = vld [vmem:[#allocation5] sm:$0x1]
      %v189 = vlog2.pop %v188
      %v190 = vmul.f32 %v189, 0.6931472
      %v191 = vadd.f32 %v187, %v190
      %v192 = vld [vmem:[#allocation6] sm:$0x1]
      %v193 = vsel %vm162, %v191, 0.0
      %194 = vadd.xlane.f32.xlu0 %v193
      %v195 = vpop.xlane.xlu0 %194
      %v196 = vadd.f32 %v192, %v195
      %vm197 = vcmask 0
      %198 = vst.msk [vmem:[#allocation6] sm:$0x1] %vm197, %v196
    $region29: #{tpu_custom_call.1} parent=1 // pred_fallthru
      _
    // Predicated region
    $region30: #{tpu_custom_call.1} parent=1 // pred_check
      _
    $region31: #{tpu_custom_call.1} parent=1 // pred_check_branch
      %200 = sbr.rel (0) target = $region33
    $region32: #{tpu_custom_call.1} parent=1 // pred_region
      %s202 = ssub.s32 16, 16
      %203 = vsyncadd [#allocation7], %s202
      %s205 = sshll.u32 [#allocation6], 4
      %s206 = int_to_ptr.vmem [resolvable:$true] %s205
      %208 = dma.vmem_to_hbm [thread:$0]  %s206, 16, %s2, [#allocation7]
    $region33: #{tpu_custom_call.1} parent=1 // pred_fallthru
      _
    // Predicated region
    $region34: #{tpu_custom_call.1} parent=1 // pred_check
      _
    $region35: #{tpu_custom_call.1} parent=1 // pred_check_branch
      %210 = sbr.rel (0) target = $region37
    $region36: #{tpu_custom_call.1} parent=1 // pred_region
      %211 = dma.done [#allocation7], 16
    $region37: #{tpu_custom_call.1} parent=1 // pred_fallthru
      _
    %212 = vsyncpa [#allocation7], 1

</llo_original>
